<compile_context>
chip_gen: v7x
topology: tpu7x:2x2x1
jax: 0.10.0
libtpu: 0.0.40
codegen_flags: <defaults>
</compile_context>

<pallas_src>
import functools

import jax
import jax.numpy as jnp
from jax.experimental import pallas as pl
from jax.experimental.pallas import tpu as pltpu


_VMEM_LIMIT = 32 * 1024 * 1024   # explicit scoped-VMEM request (safe on v5e/v6e/v7x)
_VMEM_BUDGET = 24 * 1024 * 1024  # residency budget, leaves headroom for compiler scratch


def _round_up(x, m):
    return ((x + m - 1) // m) * m


def _choose_tiles(N, tile):
    """Return (n_pad, tm, tk).

    Constraints: n_pad % tm == 0, n_pad % tk == 0, tm multiple of 8, and tk (the
    lane dim of the A block) a multiple of 128 OR the full padded node dim.
    """
    if N > tile:
        n_pad = _round_up(N, tile)
        return n_pad, tile, tile
    if N >= 16:
        # >=2 row tiles so dimension_semantics=("parallel", ...) can use both
        # v7x TensorCores; keep the whole reduction in a single k step.
        n_pad = _round_up(N, 16)
        return n_pad, n_pad // 2, n_pad
    n_pad = _round_up(N, 8)
    return n_pad, n_pad, n_pad


def _pad2(arr, rows, cols, dtype):
    out = jnp.zeros((rows, cols), dtype)
    return out.at[:arr.shape[0], :arr.shape[1]].set(arr.astype(dtype))


# -----------------------------------------------------------------------------
# Kernel 1: layer-1 GCN fused with the layer-2 linear part.
#   premul=False :  acc += A[i,k] @ x[k]        ; h1 = relu(acc @ W1 + b1)
#   premul=True  :  acc += A[i,k] @ (x@W1)[k]   ; h1 = relu(acc + b1)
#   hw2 = h1 @ W2   (written back as bf16 for kernel 2)
# -----------------------------------------------------------------------------
def gcn1_kernel(*refs, premul, resident, tk):
    if premul:
        a_ref, rhs_ref, b1_ref, w2_ref, hw2_ref, acc_ref = refs
        w1_ref = None
    else:
        a_ref, rhs_ref, w1_ref, b1_ref, w2_ref, hw2_ref, acc_ref = refs

    k = pl.program_id(1)

    @pl.when(k == 0)
    def _():
        acc_ref[...] = jnp.zeros_like(acc_ref)

    if resident:
        rhs = rhs_ref[pl.ds(pl.multiple_of(k * tk, tk), tk), :]
    else:
        rhs = rhs_ref[...]
    acc_ref[...] += jnp.dot(a_ref[...], rhs, preferred_element_type=jnp.float32)

    @pl.when(k == pl.num_programs(1) - 1)
    def _():
        agg = acc_ref[...]                                  # f32 accumulator
        if premul:
            h1 = jnp.maximum(agg + b1_ref[...], 0.0)
        else:
            h1 = jnp.dot(agg, w1_ref[...].astype(jnp.float32),
                         preferred_element_type=jnp.float32)
            h1 = jnp.maximum(h1 + b1_ref[...], 0.0)
        hw2_ref[...] = jnp.dot(h1.astype(jnp.bfloat16), w2_ref[...],
                               preferred_element_type=jnp.float32
                               ).astype(hw2_ref.dtype)


# -----------------------------------------------------------------------------
# Kernel 2: layer-2 aggregation fused with the concatenated mu|logvar head.
#   acc += A[i,k] @ (h1@W2)[k] ; h2 = acc + b2 ; out = h2 @ [Wmu|Wlv] + [bmu|blv]
# -----------------------------------------------------------------------------
def gcn2_head_kernel(a_ref, hw2_ref, b2_ref, wh_ref, bh_ref, out_ref, acc_ref,
                     *, resident, tk):
    k = pl.program_id(1)

    @pl.when(k == 0)
    def _():
        acc_ref[...] = jnp.zeros_like(acc_ref)

    if resident:
        rhs = hw2_ref[pl.ds(pl.multiple_of(k * tk, tk), tk), :]
    else:
        rhs = hw2_ref[...]
    acc_ref[...] += jnp.dot(a_ref[...], rhs, preferred_element_type=jnp.float32)

    @pl.when(k == pl.num_programs(1) - 1)
    def _():
        h2 = acc_ref[...] + b2_ref[...]                     # f32
        out_ref[...] = (jnp.dot(h2, wh_ref[...].astype(jnp.float32),
                                preferred_element_type=jnp.float32)
                        + bh_ref[...])


# -----------------------------------------------------------------------------
# Wrapper: padding / packing, two pallas_calls, unpadding.
# -----------------------------------------------------------------------------
def gencoder_forward(a_norm, x, params, *, tile=512):
    """Fused GEncoder forward. Returns (mu, logvar), each (N, z_dim) float32."""
    assert tile % 128 == 0, "tile must be a multiple of 128"
    N, in_dim = x.shape
    hid = params["w1"].shape[1]
    z_dim = params["w2"].shape[1]

    in_pad = _round_up(in_dim, 128)
    hid_pad = _round_up(hid, 128)
    z_pad = _round_up(z_dim, 128)
    n_pad, tm, tk = _choose_tiles(N, tile)
    assert n_pad % tm == 0 and n_pad % tk == 0

    # ---- layer-1 aggregation order chosen from the PADDED dims --------------
    premul = in_pad > hid_pad
    if premul:
        # tiny O(N*in*hid) matmul in f32 (XLA); the N^2 kernel then streams the
        # narrower (tk, hid_pad) RHS and uses a (tm, hid_pad) f32 accumulator.
        rhs1 = _pad2(x.astype(jnp.float32) @ params["w1"].astype(jnp.float32),
                     n_pad, hid_pad, jnp.bfloat16)
        rhs1_dim = hid_pad
    else:
        rhs1 = _pad2(x, n_pad, in_pad, jnp.bfloat16)
        rhs1_dim = in_pad

    a_p = _pad2(a_norm, n_pad, n_pad, jnp.bfloat16)
    w1_p = _pad2(params["w1"], in_pad, hid_pad, jnp.bfloat16)
    b1_p = _pad2(params["b1"], 1, hid_pad, jnp.float32)
    w2_p = _pad2(params["w2"], hid_pad, z_pad, jnp.bfloat16)
    b2_p = _pad2(params["b2"], 1, z_pad, jnp.float32)

    # fused mu|logvar head: one (z_pad, 2*z_pad) weight, one (1, 2*z_pad) bias.
    wh_p = jnp.zeros((z_pad, 2 * z_pad), jnp.bfloat16)
    wh_p = wh_p.at[:z_dim, :z_dim].set(params["wmu"].astype(jnp.bfloat16))
    wh_p = wh_p.at[:z_dim, z_pad:z_pad + z_dim].set(
        params["wlv"].astype(jnp.bfloat16))
    bh_p = jnp.zeros((1, 2 * z_pad), jnp.float32)
    bh_p = bh_p.at[:, :z_dim].set(params["bmu"].astype(jnp.float32))
    bh_p = bh_p.at[:, z_pad:z_pad + z_dim].set(params["blv"].astype(jnp.float32))

    grid = (n_pad // tm, n_pad // tk)
    cparams = pltpu.CompilerParams(
        dimension_semantics=("parallel", "arbitrary"),
        vmem_limit_bytes=_VMEM_LIMIT)

    # ---- kernel 1 ------------------------------------------------------------
    fixed1 = (2 * tm * tk * 2                                   # A (double-buffered bf16)
              + (0 if premul else 2 * in_pad * hid_pad * 2)     # W1
              + 2 * 8 * hid_pad * 4                             # b1
              + 2 * hid_pad * z_pad * 2                         # W2
              + 2 * tm * z_pad * 2                              # hw2 output block
              + tm * rhs1_dim * 4)                              # f32 accumulator
    resident1 = fixed1 + 2 * n_pad * rhs1_dim * 2 <= _VMEM_BUDGET

    in_specs1 = [pl.BlockSpec((tm, tk), lambda i, k: (i, k))]               # A
    inputs1 = [a_p, rhs1]
    if resident1:   # fetched once, sliced per k inside the kernel
        in_specs1.append(pl.BlockSpec((n_pad, rhs1_dim), lambda i, k: (0, 0)))
    else:           # fallback: streamed per-k chunks
        in_specs1.append(pl.BlockSpec((tk, rhs1_dim), lambda i, k: (k, 0)))
    if not premul:
        in_specs1.append(pl.BlockSpec((in_pad, hid_pad), lambda i, k: (0, 0)))  # W1
        inputs1.append(w1_p)
    in_specs1 += [pl.BlockSpec((1, hid_pad), lambda i, k: (0, 0)),           # b1
                  pl.BlockSpec((hid_pad, z_pad), lambda i, k: (0, 0))]       # W2
    inputs1 += [b1_p, w2_p]

    rhs1_bytes = (n_pad * rhs1_dim * 2 if resident1
                  else (n_pad // tm) * n_pad * rhs1_dim * 2)
    cost1 = pl.CostEstimate(
        flops=(2 * n_pad * n_pad * rhs1_dim
               + (0 if premul else 2 * n_pad * in_pad * hid_pad)
               + 2 * n_pad * hid_pad * z_pad),
        transcendentals=0,
        bytes_accessed=(2 * n_pad * n_pad + rhs1_bytes
                        + 2 * in_pad * hid_pad + 2 * hid_pad * z_pad
                        + 2 * n_pad * z_pad))

    hw2 = pl.pallas_call(
        functools.partial(gcn1_kernel, premul=premul, resident=resident1, tk=tk),
        out_shape=jax.ShapeDtypeStruct((n_pad, z_pad), jnp.bfloat16),
        grid_spec=pltpu.PrefetchScalarGridSpec(
            num_scalar_prefetch=0,
            grid=grid,
            in_specs=in_specs1,
            out_specs=pl.BlockSpec((tm, z_pad), lambda i, k: (i, 0)),
            scratch_shapes=[pltpu.VMEM((tm, rhs1_dim), jnp.float32)]),
        compiler_params=cparams,
        cost_estimate=cost1,
    )(*inputs1)

    # ---- kernel 2 ------------------------------------------------------------
    fixed2 = (2 * tm * tk * 2
              + 2 * 8 * z_pad * 4
              + 2 * z_pad * (2 * z_pad) * 2
              + 2 * 8 * (2 * z_pad) * 4
              + 2 * tm * (2 * z_pad) * 4
              + tm * z_pad * 4)
    resident2 = fixed2 + 2 * n_pad * z_pad * 2 <= _VMEM_BUDGET

    in_specs2 = [pl.BlockSpec((tm, tk), lambda i, k: (i, k))]               # A
    if resident2:
        in_specs2.append(pl.BlockSpec((n_pad, z_pad), lambda i, k: (0, 0)))  # h1@W2 resident
    else:
        in_specs2.append(pl.BlockSpec((tk, z_pad), lambda i, k: (k, 0)))
    in_specs2 += [pl.BlockSpec((1, z_pad), lambda i, k: (0, 0)),             # b2
                  pl.BlockSpec((z_pad, 2 * z_pad), lambda i, k: (0, 0)),     # [Wmu|Wlv]
                  pl.BlockSpec((1, 2 * z_pad), lambda i, k: (0, 0))]         # [bmu|blv]

    hw2_bytes = (n_pad * z_pad * 2 if resident2
                 else (n_pad // tm) * n_pad * z_pad * 2)
    cost2 = pl.CostEstimate(
        flops=2 * n_pad * n_pad * z_pad + 2 * n_pad * z_pad * (2 * z_pad),
        transcendentals=0,
        bytes_accessed=(2 * n_pad * n_pad + hw2_bytes
                        + 2 * z_pad * 2 * z_pad + 4 * n_pad * 2 * z_pad))

    # NOTE: output kept f32 (mu/logvar are small O(N*z)); cast to bf16 here if
    # the caller tolerates it.
    out = pl.pallas_call(
        functools.partial(gcn2_head_kernel, resident=resident2, tk=tk),
        out_shape=jax.ShapeDtypeStruct((n_pad, 2 * z_pad), jnp.float32),
        grid_spec=pltpu.PrefetchScalarGridSpec(
            num_scalar_prefetch=0,
            grid=grid,
            in_specs=in_specs2,
            out_specs=pl.BlockSpec((tm, 2 * z_pad), lambda i, k: (i, 0)),
            scratch_shapes=[pltpu.VMEM((tm, z_pad), jnp.float32)]),
        compiler_params=cparams,
        cost_estimate=cost2,
    )(a_p, hw2, b2_p, wh_p, bh_p)

    mu = out[:N, :z_dim]
    logvar = out[:N, z_pad:z_pad + z_dim]
    return mu, logvar


# -----------------------------------------------------------------------------
# Plain-JAX glue: dense symmetric-normalized adjacency (PyG GCNConv defaults).
# -----------------------------------------------------------------------------
def build_norm_adj(edge_index, num_nodes):
    src = edge_index[0]
    dst = edge_index[1]
    a = jnp.zeros((num_nodes, num_nodes), jnp.float32)
    a = a.at[dst, src].set(1.0)                                  # edge j -> i
    a = jnp.maximum(a, jnp.eye(num_nodes, dtype=jnp.float32))    # self-loops
    deg = a.sum(axis=1)
    dinv = jnp.where(deg > 0, 1.0 / jnp.sqrt(deg), 0.0)
    return dinv[:, None] * a * dinv[None, :]


def init_params(key, in_dim, hid, z_dim):
    ks = jax.random.split(key, 4)

    def glorot(k, shape):
        lim = jnp.sqrt(6.0 / (shape[0] + shape[1]))
        return jax.random.uniform(k, shape, jnp.float32, -lim, lim)

    return {
        "w1":  glorot(ks[0], (in_dim, hid)),  "b1":  0.01 * jnp.ones((1, hid), jnp.float32),
        "w2":  glorot(ks[1], (hid, z_dim)),   "b2":  0.01 * jnp.ones((1, z_dim), jnp.float32),
        "wmu": glorot(ks[2], (z_dim, z_dim)), "bmu": 0.02 * jnp.ones((1, z_dim), jnp.float32),
        "wlv": glorot(ks[3], (z_dim, z_dim)), "blv": -0.02 * jnp.ones((1, z_dim), jnp.float32),
    }


if __name__ == "__main__":
    def run_case(key, N, in_dim, hid, z_dim, tile):
        kx, kp = jax.random.split(key)
        x = jax.random.normal(kx, (N, in_dim), jnp.float32)

        # symmetric ring graph: edges i <-> (i+1) mod N
        i = jnp.arange(N)
        j = (i + 1) % N
        edge_index = jnp.stack([jnp.concatenate([i, j]),
                                jnp.concatenate([j, i])], axis=0).astype(jnp.int32)
        a_norm = build_norm_adj(edge_index, N)
        params = init_params(kp, in_dim, hid, z_dim)

        mu, logvar = gencoder_forward(a_norm, x, params, tile=tile)
        jax.block_until_ready((mu, logvar))

        # pure-f32 JAX reference (bf16 kernel operands -> loose tolerance)
        h1 = jnp.maximum(a_norm @ (x @ params["w1"]) + params["b1"], 0.0)
        h2 = a_norm @ (h1 @ params["w2"]) + params["b2"]
        mu_ref = h2 @ params["wmu"] + params["bmu"]
        lv_ref = h2 @ params["wlv"] + params["blv"]
        assert mu.shape == (N, z_dim) and logvar.shape == (N, z_dim)
        assert jnp.allclose(mu, mu_ref, atol=7e-2, rtol=7e-2), "mu mismatch"
        assert jnp.allclose(logvar, lv_ref, atol=7e-2, rtol=7e-2), "logvar mismatch"

    key = jax.random.PRNGKey(0)
    k1, k2, k3 = jax.random.split(key, 3)

    # Module defaults (hid=64, z_dim=32). Three configs to exercise all paths:
    #  A) tiny single-tile path, aggregate-first layer 1.
    #  B) in_dim > hid (premul x@W1), multi-tile grid + k-accumulation.
    #  C) aggregate-first layer 1 with multi-tile grid + k-accumulation.
    run_case(k1, N=8,   in_dim=16,  hid=64, z_dim=32, tile=512)
    run_case(k2, N=200, in_dim=300, hid=64, z_dim=32, tile=128)
    run_case(k3, N=200, in_dim=16,  hid=64, z_dim=32, tile=128)

    print("KERNEL_OK")
</pallas_src>

<mosaic_0001>
module attributes {stable_mosaic.version = 11 : i64} {
  func.func @gcn1_kernel(%arg0: i32, %arg1: i32, %arg2: memref<8x8xbf16, #tpu.memory_space<vmem>>, %arg3: memref<8x128xbf16, #tpu.memory_space<vmem>>, %arg4: memref<128x128xbf16, #tpu.memory_space<vmem>>, %arg5: memref<1x128xf32, #tpu.memory_space<vmem>>, %arg6: memref<128x128xbf16, #tpu.memory_space<vmem>>, %arg7: memref<8x128xbf16, #tpu.memory_space<vmem>>, %arg8: memref<8x128xf32, #tpu.memory_space<vmem>>) attributes {dimension_semantics = [#tpu.dimension_semantics<parallel>, #tpu.dimension_semantics<arbitrary>], iteration_bounds = array<i64: 1, 1>, scalar_prefetch = 0 : i64, scratch_operands = 1 : i64, tpu.core_type = #tpu.core_type<tc>, window_params = [{transform_indices = @transform_0, window_bounds = array<i64: 8, 8>}, {pipeline_mode = #tpu.pipeline_mode<synchronous>, transform_indices = @transform_1, window_bounds = array<i64: 8, 128>}, {pipeline_mode = #tpu.pipeline_mode<synchronous>, transform_indices = @transform_2, window_bounds = array<i64: 128, 128>}, {pipeline_mode = #tpu.pipeline_mode<synchronous>, transform_indices = @transform_3, window_bounds = array<i64: 1, 128>}, {pipeline_mode = #tpu.pipeline_mode<synchronous>, transform_indices = @transform_4, window_bounds = array<i64: 128, 128>}, {transform_indices = @transform_5, window_bounds = array<i64: 8, 128>}]} {
    %c0_i32 = arith.constant 0 : i32
    %0 = arith.cmpi eq, %arg1, %c0_i32 : i32
    %1 = arith.extui %0 : i1 to i32
    %c0_i32_0 = arith.constant 0 : i32
    %2 = arith.cmpi ne, %1, %c0_i32_0 : i32
    scf.if %2 {
      %cst_9 = arith.constant 0.000000e+00 : f32
      %15 = vector.broadcast %cst_9 : f32 to vector<8x128xf32>
      %c0_10 = arith.constant 0 : index
      %c0_11 = arith.constant 0 : index
      %16 = vector.load %arg8[%c0_10, %c0_11] : memref<8x128xf32, #tpu.memory_space<vmem>>, vector<8x128xf32>
      tpu.vector_store %arg8[%c0_10, %c0_11], %15 {strides = array<i32>} : memref<8x128xf32, #tpu.memory_space<vmem>>, vector<8x128xf32>,
    } else {
    }
    %c8_i32 = arith.constant 8 : i32
    %3 = arith.muli %arg1, %c8_i32 : i32
    %4 = tpu.assume_multiple %3, 8 : i32
    %5 = arith.index_cast %4 : i32 to index
    %c0 = arith.constant 0 : index
    %6 = vector.load %arg3[%5, %c0] : memref<8x128xbf16, #tpu.memory_space<vmem>>, vector<8x128xbf16>
    %c0_1 = arith.constant 0 : index
    %c0_2 = arith.constant 0 : index
    %7 = vector.load %arg8[%c0_1, %c0_2] : memref<8x128xf32, #tpu.memory_space<vmem>>, vector<8x128xf32>
    %c0_3 = arith.constant 0 : index
    %c0_4 = arith.constant 0 : index
    %8 = vector.load %arg2[%c0_3, %c0_4] : memref<8x8xbf16, #tpu.memory_space<vmem>>, vector<8x8xbf16>
    %cst = arith.constant dense<0.000000e+00> : vector<8x128xf32>
    %9 = tpu.matmul %8, %6, %cst {dimension_numbers = #tpu.dot_dimension_numbers<[1], [0], [0], [1], [0, 0, 1, 1], [], []>} : vector<8x8xbf16>, vector<8x128xbf16>, vector<8x128xf32> -> vector<8x128xf32>
    %10 = arith.addf %7, %9 : vector<8x128xf32>
    %c0_5 = arith.constant 0 : index
    %c0_6 = arith.constant 0 : index
    %11 = vector.load %arg8[%c0_5, %c0_6] : memref<8x128xf32, #tpu.memory_space<vmem>>, vector<8x128xf32>
    tpu.vector_store %arg8[%c0_5, %c0_6], %10 {strides = array<i32>} : memref<8x128xf32, #tpu.memory_space<vmem>>, vector<8x128xf32>,
    %c0_i32_7 = arith.constant 0 : i32
    %12 = arith.cmpi eq, %arg1, %c0_i32_7 : i32
    %13 = arith.extui %12 : i1 to i32
    %c0_i32_8 = arith.constant 0 : i32
    %14 = arith.cmpi ne, %13, %c0_i32_8 : i32
    scf.if %14 {
      %c0_9 = arith.constant 0 : index
      %c0_10 = arith.constant 0 : index
      %15 = vector.load %arg8[%c0_9, %c0_10] : memref<8x128xf32, #tpu.memory_space<vmem>>, vector<8x128xf32>
      %c0_11 = arith.constant 0 : index
      %c0_12 = arith.constant 0 : index
      %16 = vector.load %arg4[%c0_11, %c0_12] : memref<128x128xbf16, #tpu.memory_space<vmem>>, vector<128x128xbf16>
      %17 = arith.extf %16 : vector<128x128xbf16> to vector<128x128xf32>
      %cst_13 = arith.constant dense<0.000000e+00> : vector<8x128xf32>
      %18 = tpu.matmul %15, %17, %cst_13 {dimension_numbers = #tpu.dot_dimension_numbers<[1], [0], [0], [1], [0, 0, 1, 1], [], []>} : vector<8x128xf32>, vector<128x128xf32>, vector<8x128xf32> -> vector<8x128xf32>
      %c0_14 = arith.constant 0 : index
      %c0_15 = arith.constant 0 : index
      %19 = vector.load %arg5[%c0_14, %c0_15] : memref<1x128xf32, #tpu.memory_space<vmem>>, vector<1x128xf32>
      %20 = vector.broadcast %19 : vector<1x128xf32> to vector<8x128xf32>
      %21 = arith.addf %18, %20 : vector<8x128xf32>
      %cst_16 = arith.constant 0.000000e+00 : f32
      %22 = vector.broadcast %cst_16 : f32 to vector<8x128xf32>
      %23 = arith.maximumf %21, %22 : vector<8x128xf32>
      %24 = arith.truncf %23 : vector<8x128xf32> to vector<8x128xbf16>
      %c0_17 = arith.constant 0 : index
      %c0_18 = arith.constant 0 : index
      %25 = vector.load %arg6[%c0_17, %c0_18] : memref<128x128xbf16, #tpu.memory_space<vmem>>, vector<128x128xbf16>
      %cst_19 = arith.constant dense<0.000000e+00> : vector<8x128xf32>
      %26 = tpu.matmul %24, %25, %cst_19 {dimension_numbers = #tpu.dot_dimension_numbers<[1], [0], [0], [1], [0, 0, 1, 1], [], []>} : vector<8x128xbf16>, vector<128x128xbf16>, vector<8x128xf32> -> vector<8x128xf32>
      %27 = arith.truncf %26 : vector<8x128xf32> to vector<8x128xbf16>
      %c0_20 = arith.constant 0 : index
      %c0_21 = arith.constant 0 : index
      %28 = vector.load %arg7[%c0_20, %c0_21] : memref<8x128xbf16, #tpu.memory_space<vmem>>, vector<8x128xbf16>
      tpu.vector_store %arg7[%c0_20, %c0_21], %27 {strides = array<i32>} : memref<8x128xbf16, #tpu.memory_space<vmem>>, vector<8x128xbf16>,
    } else {
    }
    return
  }
  func.func @transform_0(%arg0: i32, %arg1: i32) -> (i32, i32) {
    %c0_i32 = arith.constant 0 : i32
    return %arg0, %arg1 : i32, i32
  }
  func.func @transform_1(%arg0: i32, %arg1: i32) -> (i32, i32) {
    %c0_i32 = arith.constant 0 : i32
    %c0_i32_0 = arith.constant 0 : i32
    %c0_i32_1 = arith.constant 0 : i32
    return %c0_i32, %c0_i32_0 : i32, i32
  }
  func.func @transform_2(%arg0: i32, %arg1: i32) -> (i32, i32) {
    %c0_i32 = arith.constant 0 : i32
    %c0_i32_0 = arith.constant 0 : i32
    %c0_i32_1 = arith.constant 0 : i32
    return %c0_i32, %c0_i32_0 : i32, i32
  }
  func.func @transform_3(%arg0: i32, %arg1: i32) -> (i32, i32) {
    %c0_i32 = arith.constant 0 : i32
    %c0_i32_0 = arith.constant 0 : i32
    %c0_i32_1 = arith.constant 0 : i32
    return %c0_i32, %c0_i32_0 : i32, i32
  }
  func.func @transform_4(%arg0: i32, %arg1: i32) -> (i32, i32) {
    %c0_i32 = arith.constant 0 : i32
    %c0_i32_0 = arith.constant 0 : i32
    %c0_i32_1 = arith.constant 0 : i32
    return %c0_i32, %c0_i32_0 : i32, i32
  }
  func.func @transform_5(%arg0: i32, %arg1: i32) -> (i32, i32) {
    %c0_i32 = arith.constant 0 : i32
    %c0_i32_0 = arith.constant 0 : i32
    return %arg0, %c0_i32 : i32, i32
  }
}

</mosaic_0001>

<llo_original>
// kernel: tpu_custom_call.1
$region0: #{tpu_custom_call.1}
  #allocation0 [shape = 'u32[]', space=smem, size = 0x4, offset = 0x4, fixed_abs, tag = 'smem constant byte address 0x4 - core index']
  #allocation1 [shape = 'u32[144,128]{1,0:T(1,128)}', space=vmem, size = 0x12000, scoped, tag = 'internal scratch']
  #allocation2 [shape = 'f32[8,128]{1,0:T(8,128)}', space=vmem, size = 0x1000, scoped, tag = 'scratch operand']
  %s0 = inlined_call_operand.hbm [shape: bf16[8,8], index: 0, kind: input, shape index: {}]
  %s1 = inlined_call_operand.hbm [shape: bf16[8,128], index: 1, kind: input, shape index: {}]
  %s2 = inlined_call_operand.hbm [shape: bf16[128,128], index: 2, kind: input, shape index: {}]
  %s3 = inlined_call_operand.vmem [shape: f32[1,128], index: 3, kind: input, shape index: {}]
  %s4 = inlined_call_operand.hbm [shape: bf16[128,128], index: 4, kind: input, shape index: {}]
  %s5 = inlined_call_operand.hbm [shape: bf16[8,128], index: 5, kind: output, shape index: {}]
  %s6 = sld [smem:[#allocation0]]
  $region54: #{tpu_custom_call.1} parent=0
    _
  %s8 = ssub.s32 1, %s6
  %s9 = scalar_select 0, %s8, %s6
  $region1: #{tpu_custom_call.1} parent=0
    #allocation3 [shape = 'u8[2048]{0}', space=vmem, size = 0x800, scoped, tag = 'input window, operand 0, single buffered']
    #allocation4 [shape = 's32[1]{0}', space=sflag, size = 0x4, scoped, tag = 'scoped memory for tpu_custom_call.1']
    #allocation5 [shape = 's32[1]{0}', space=sflag, size = 0x4, scoped, tag = 'scoped memory for tpu_custom_call.1']
    #allocation6 [shape = 'u8[2048]{0}', space=vmem, size = 0x800, scoped, tag = 'input window, operand 1, single buffered']
    #allocation7 [shape = 's32[1]{0}', space=sflag, size = 0x4, scoped, tag = 'scoped memory for tpu_custom_call.1']
    #allocation8 [shape = 'u8[32768]{0}', space=vmem, size = 0x8000, scoped, tag = 'input window, operand 2, single buffered']
    #allocation9 [shape = 'u8[32768]{0}', space=vmem, size = 0x8000, scoped, tag = 'input window, operand 4, single buffered']
    #allocation10 [shape = 's32[1]{0}', space=sflag, size = 0x4, scoped, tag = 'scoped memory for tpu_custom_call.1']
    #allocation11 [shape = 'u8[2048]{0}', space=vmem, size = 0x800, scoped, tag = 'output window, operand 0, single buffered']
    %10 = vsyncpa [#allocation4], 0
    %11 = vsyncpa [#allocation7], 0
    %12 = vsyncpa [#allocation10], 0
    %13 = vsyncpa [#allocation5], 0
    // Predicated region
    $region2: #{tpu_custom_call.1} parent=1 // pred_check
      _
    $region3: #{tpu_custom_call.1} parent=1 // pred_check_branch
      %15 = sbr.rel (0) target = $region5
    $region4: #{tpu_custom_call.1} parent=1 // pred_region
      %s17 = ssub.s32 64, 64
      %18 = vsyncadd [#allocation4], %s17
      %s20 = sshll.u32 [#allocation3], 4
      %s21 = int_to_ptr.vmem [resolvable:$true] %s20
      %23 = dma.hbm_to_vmem [thread:$0]  %s0, 64, %s21, [#allocation4]
    $region5: #{tpu_custom_call.1} parent=1 // pred_fallthru
      _
    // Predicated region
    $region6: #{tpu_custom_call.1} parent=1 // pred_check
      _
    $region7: #{tpu_custom_call.1} parent=1 // pred_check_branch
      %25 = sbr.rel (0) target = $region9
    $region8: #{tpu_custom_call.1} parent=1 // pred_region
      %s27 = ssub.s32 64, 64
      %28 = vsyncadd [#allocation7], %s27
      %s30 = sshll.u32 [#allocation6], 4
      %s31 = int_to_ptr.vmem [resolvable:$true] %s30
      %33 = dma.hbm_to_vmem [thread:$0]  %s1, 64, %s31, [#allocation7]
    $region9: #{tpu_custom_call.1} parent=1 // pred_fallthru
      _
    // Predicated region
    $region10: #{tpu_custom_call.1} parent=1 // pred_check
      _
    $region11: #{tpu_custom_call.1} parent=1 // pred_check_branch
      %35 = sbr.rel (0) target = $region13
    $region12: #{tpu_custom_call.1} parent=1 // pred_region
      %s37 = ssub.s32 1024, 1024
      %38 = vsyncadd [#allocation7], %s37
      %s39 = sshll.u32 [#allocation8], 4
      %s40 = int_to_ptr.vmem [resolvable:$true] %s39
      %45 = dma.hbm_to_vmem [thread:$0]  %s2, 1024, %s40, [#allocation7], 64, 64, 4
    $region13: #{tpu_custom_call.1} parent=1 // pred_fallthru
      _
    // Predicated region
    $region14: #{tpu_custom_call.1} parent=1 // pred_check
      _
    $region15: #{tpu_custom_call.1} parent=1 // pred_check_branch
      %47 = sbr.rel (0) target = $region17
    $region16: #{tpu_custom_call.1} parent=1 // pred_region
      _
    $region17: #{tpu_custom_call.1} parent=1 // pred_fallthru
      _
    // Predicated region
    $region18: #{tpu_custom_call.1} parent=1 // pred_check
      _
    $region19: #{tpu_custom_call.1} parent=1 // pred_check_branch
      %49 = sbr.rel (0) target = $region21
    $region20: #{tpu_custom_call.1} parent=1 // pred_region
      %s51 = ssub.s32 1024, 1024
      %52 = vsyncadd [#allocation10], %s51
      %s53 = sshll.u32 [#allocation9], 4
      %s54 = int_to_ptr.vmem [resolvable:$true] %s53
      %59 = dma.hbm_to_vmem [thread:$0]  %s4, 1024, %s54, [#allocation10], 64, 64, 4
    $region21: #{tpu_custom_call.1} parent=1 // pred_fallthru
      _
    // Predicated region
    $region22: #{tpu_custom_call.1} parent=1 // pred_check
      _
    $region23: #{tpu_custom_call.1} parent=1 // pred_check_branch
      %61 = sbr.rel (0) target = $region25
    $region24: #{tpu_custom_call.1} parent=1 // pred_region
      %62 = dma.done [#allocation4], 64
    $region25: #{tpu_custom_call.1} parent=1 // pred_fallthru
      _
    // Predicated region
    $region26: #{tpu_custom_call.1} parent=1 // pred_check
      _
    $region27: #{tpu_custom_call.1} parent=1 // pred_check_branch
      %64 = sbr.rel (0) target = $region29
    $region28: #{tpu_custom_call.1} parent=1 // pred_region
      %65 = dma.done [#allocation7], 64
    $region29: #{tpu_custom_call.1} parent=1 // pred_fallthru
      _
    // Predicated region
    $region30: #{tpu_custom_call.1} parent=1 // pred_check
      _
    $region31: #{tpu_custom_call.1} parent=1 // pred_check_branch
      %67 = sbr.rel (0) target = $region33
    $region32: #{tpu_custom_call.1} parent=1 // pred_region
      %68 = dma.done [#allocation7], 1024
    $region33: #{tpu_custom_call.1} parent=1 // pred_fallthru
      _
    // Predicated region
    $region34: #{tpu_custom_call.1} parent=1 // pred_check
      _
    $region35: #{tpu_custom_call.1} parent=1 // pred_check_branch
      %70 = sbr.rel (0) target = $region37
    $region36: #{tpu_custom_call.1} parent=1 // pred_region
      %71 = dma.done [#allocation10], 1024
    $region37: #{tpu_custom_call.1} parent=1 // pred_fallthru
      _
    %p73 = scmp.eq.s32.totalorder 0, 0
    // Predicated region
    $region38: #{tpu_custom_call.1} parent=1 // pred_check
      %p74 = pneg %p73
    $region39: #{tpu_custom_call.1} parent=1 // pred_check_branch
      %76 = sbr.rel (%p74) target = $region41
    $region40: #{tpu_custom_call.1} parent=1 // pred_region
      %77 = vst [vmem:[#allocation2] sm:$0xff] 0.0
    $region41: #{tpu_custom_call.1} parent=1 // pred_fallthru
      _
    %s78 = smul.u32 0, 8
    %s79 = sshra.s32 %s78, 3
    %s80 = sand.u32 %s78, 7
    %s81 = smul.addr %s79, 4
    %s82 = scalar_lea.vmem [#allocation6], %s81
    %v83 = vld [vmem:[%s82] sm:$0xf]
    %v84 = vld [vmem:[#allocation2] sm:$0xff]
    %v85 = vld [vmem:[#allocation3] sm:$0xf]
    %vm86 = vcmask 64512
    %v88 = vsel %vm86, %v85, 0
    %vm90 = vcmask 1043456
    %v92 = vsel %vm90, %v83, 0
    %94 = vmatprep.subr.bf16.mxu0 0
    %95 = vmatpush1.bf16.msra.mxu0 %v92
    %96 = vmatprep.subr.bf16.mxu0 0
    %97 = vmatpush1.bf16.msra.mxu0 0
    %98 = vmatprep.subr.bf16.mxu0 0
    %99 = vmatpush1.bf16.msra.mxu0 0
    %100 = vmatprep.subr.bf16.mxu0 0
    %101 = vmatpush1.bf16.msra.mxu0 0
    %102 = vmatprep.subr.bf16.mxu0 0
    %103 = vmatpush1.bf16.msra.mxu0 0
    %104 = vmatprep.subr.bf16.mxu0 0
    %105 = vmatpush1.bf16.msra.mxu0 0
    %106 = vmatprep.subr.bf16.mxu0 0
    %107 = vmatpush1.bf16.msra.mxu0 0
    %108 = vmatprep.subr.bf16.mxu0 0
    %109 = vmatpush1.bf16.msra.mxu0 0
    %110 = vmatprep.subr.bf16.mxu0 0
    %111 = vmatpush1.bf16.msra.mxu0 0
    %112 = vmatprep.subr.bf16.mxu0 0
    %113 = vmatpush1.bf16.msra.mxu0 0
    %114 = vmatprep.subr.bf16.mxu0 0
    %115 = vmatpush1.bf16.msra.mxu0 0
    %116 = vmatprep.subr.bf16.mxu0 0
    %117 = vmatpush1.bf16.msra.mxu0 0
    %118 = vmatprep.subr.bf16.mxu0 0
    %119 = vmatpush1.bf16.msra.mxu0 0
    %120 = vmatprep.subr.bf16.mxu0 0
    %121 = vmatpush1.bf16.msra.mxu0 0
    %122 = vmatprep.subr.bf16.mxu0 0
    %123 = vmatpush1.bf16.msra.mxu0 0
    %124 = vmatprep.subr.bf16.mxu0 0
    %125 = vmatpush1.bf16.msra.mxu0 0
    %126 = vmatprep.mubr.bf16.mxu0 0
    %127 = vmatmul.mubr.bf16.gmra.mrb[0].mxu0 %v88
    %v128 = vpop.f32.mrb[0].mxu0
    %v129 = vadd.f32 0.0, %v128
    %v130 = vpop.f32.mrb[0].mxu0
    %v131 = vpop.f32.mrb[0].mxu0
    %v132 = vpop.f32.mrb[0].mxu0
    %133 = vdwg.mxu0
    %v134 = vadd.f32 %v84, %v129
    %135 = vst [vmem:[#allocation2] sm:$0xff] %v134
    // Predicated region
    $region42: #{tpu_custom_call.1} parent=1 // pred_check
      %p136 = pneg %p73
    $region43: #{tpu_custom_call.1} parent=1 // pred_check_branch
      %138 = sbr.rel (%p136) target = $region45
    $region44: #{tpu_custom_call.1} parent=1 // pred_region
      %v139 = vld [vmem:[#allocation2] sm:$0xff]
      %v140 = vld [vmem:[#allocation8] sm:$0xf]
      %v141 = vld [vmem:[#allocation8 + $0x4] sm:$0xf]
      %v142 = vld [vmem:[#allocation8 + $0x8] sm:$0xf]
      %v143 = vld [vmem:[#allocation8 + $0xc] sm:$0xf]
      %v144 = vld [vmem:[#allocation8 + $0x10] sm:$0xf]
      %v145 = vld [vmem:[#allocation8 + $0x14] sm:$0xf]
      %v146 = vld [vmem:[#allocation8 + $0x18] sm:$0xf]
      %v147 = vld [vmem:[#allocation8 + $0x1c] sm:$0xf]
      %v148 = vld [vmem:[#allocation8 + $0x20] sm:$0xf]
      %v149 = vld [vmem:[#allocation8 + $0x24] sm:$0xf]
      %v150 = vld [vmem:[#allocation8 + $0x28] sm:$0xf]
      %v151 = vld [vmem:[#allocation8 + $0x2c] sm:$0xf]
      %v152 = vld [vmem:[#allocation8 + $0x30] sm:$0xf]
      %v153 = vld [vmem:[#allocation8 + $0x34] sm:$0xf]
      %v154 = vld [vmem:[#allocation8 + $0x38] sm:$0xf]
      %v155 = vld [vmem:[#allocation8 + $0x3c] sm:$0xf]
      %v156 = vunpack.c.l.bf16 %v140
      %v157 = vunpack.c.l.bf16 %v141
      %v158 = vunpack.c.l.bf16 %v142
      %v159 = vunpack.c.l.bf16 %v143
      %v160 = vunpack.c.l.bf16 %v144
      %v161 = vunpack.c.l.bf16 %v145
      %v162 = vunpack.c.l.bf16 %v146
      %v163 = vunpack.c.l.bf16 %v147
      %v164 = vunpack.c.l.bf16 %v148
      %v165 = vunpack.c.l.bf16 %v149
      %v166 = vunpack.c.l.bf16 %v150
      %v167 = vunpack.c.l.bf16 %v151
      %v168 = vunpack.c.l.bf16 %v152
      %v169 = vunpack.c.l.bf16 %v153
      %v170 = vunpack.c.l.bf16 %v154
      %v171 = vunpack.c.l.bf16 %v155
      %v172 = vld [vmem:[%s3] sm:$0x1]
      %v174 = vlaneseq
      %v175 = vshrl.u32 %v174, 7
      %v176 = vsub.s32 0, %v175
      %v177 = vrot.slane %v172, %v176
      %179 = vmatprep.subr.mxu0 0.0
      %180 = vmatpush1.msra.mxu0 %v156
      %181 = vmatprep.subr.mxu0 0.0
      %182 = vmatpush1.msra.mxu0 %v157
      %183 = vmatprep.subr.mxu0 0.0
      %184 = vmatpush1.msra.mxu0 %v158
      %185 = vmatprep.subr.mxu0 0.0
      %186 = vmatpush1.msra.mxu0 %v159
      %187 = vmatprep.subr.mxu0 0.0
      %188 = vmatpush1.msra.mxu0 %v160
      %189 = vmatprep.subr.mxu0 0.0
      %190 = vmatpush1.msra.mxu0 %v161
      %191 = vmatprep.subr.mxu0 0.0
      %192 = vmatpush1.msra.mxu0 %v162
      %193 = vmatprep.subr.mxu0 0.0
      %194 = vmatpush1.msra.mxu0 %v163
      %195 = vmatprep.subr.mxu0 0.0
      %196 = vmatpush1.msra.mxu0 %v164
      %197 = vmatprep.subr.mxu0 0.0
      %198 = vmatpush1.msra.mxu0 %v165
      %199 = vmatprep.subr.mxu0 0.0
      %200 = vmatpush1.msra.mxu0 %v166
      %201 = vmatprep.subr.mxu0 0.0
      %202 = vmatpush1.msra.mxu0 %v167
      %203 = vmatprep.subr.mxu0 0.0
      %204 = vmatpush1.msra.mxu0 %v168
      %205 = vmatprep.subr.mxu0 0.0
      %206 = vmatpush1.msra.mxu0 %v169
      %207 = vmatprep.subr.mxu0 0.0
      %208 = vmatpush1.msra.mxu0 %v170
      %209 = vmatprep.subr.mxu0 0.0
      %210 = vmatpush1.msra.mxu0 %v171
      %211 = vmatprep.subr.mxu0 0.0
      %212 = vmatpush1.msra.mxu0 0.0
      %213 = vmatprep.subr.mxu0 0.0
      %214 = vmatpush1.msra.mxu0 0.0
      %215 = vmatprep.subr.mxu0 0.0
      %216 = vmatpush1.msra.mxu0 0.0
      %217 = vmatprep.subr.mxu0 0.0
      %218 = vmatpush1.msra.mxu0 0.0
      %219 = vmatprep.subr.mxu0 0.0
      %220 = vmatpush1.msra.mxu0 0.0
      %221 = vmatprep.subr.mxu0 0.0
      %222 = vmatpush1.msra.mxu0 0.0
      %223 = vmatprep.subr.mxu0 0.0
      %224 = vmatpush1.msra.mxu0 0.0
      %225 = vmatprep.subr.mxu0 0.0
      %226 = vmatpush1.msra.mxu0 0.0
      %227 = vmatprep.subr.mxu0 0.0
      %228 = vmatpush1.msra.mxu0 0.0
      %229 = vmatprep.subr.mxu0 0.0
      %230 = vmatpush1.msra.mxu0 0.0
      %231 = vmatprep.subr.mxu0 0.0
      %232 = vmatpush1.msra.mxu0 0.0
      %233 = vmatprep.subr.mxu0 0.0
      %234 = vmatpush1.msra.mxu0 0.0
      %235 = vmatprep.subr.mxu0 0.0
      %236 = vmatpush1.msra.mxu0 0.0
      %237 = vmatprep.subr.mxu0 0.0
      %238 = vmatpush1.msra.mxu0 0.0
      %239 = vmatprep.subr.mxu0 0.0
      %240 = vmatpush1.msra.mxu0 0.0
      %241 = vmatprep.subr.mxu0 0.0
      %242 = vmatpush1.msra.mxu0 0.0
      %243 = vmatprep.mubr.f32.mxu0 0.0
      %244 = vmatmul.mubr.f32.gmra.mrb[0].mxu0 %v139
      %v245 = vpop.f32.mrb[0].mxu0
      %v246 = vadd.f32 %v177, %v245
      %v247 = vpop.f32.mrb[0].mxu0
      %248 = vdwg.mxu0
      %v249 = vmax.f32 %v246, 0.0
      %v250 = vpack.c.bf16 %v249, %v249
      %v251 = vld [vmem:[#allocation9] sm:$0xf]
      %v252 = vld [vmem:[#allocation9 + $0x4] sm:$0xf]
      %v253 = vld [vmem:[#allocation9 + $0x8] sm:$0xf]
      %v254 = vld [vmem:[#allocation9 + $0xc] sm:$0xf]
      %v255 = vld [vmem:[#allocation9 + $0x10] sm:$0xf]
      %v256 = vld [vmem:[#allocation9 + $0x14] sm:$0xf]
      %v257 = vld [vmem:[#allocation9 + $0x18] sm:$0xf]
      %v258 = vld [vmem:[#allocation9 + $0x1c] sm:$0xf]
      %v259 = vld [vmem:[#allocation9 + $0x20] sm:$0xf]
      %v260 = vld [vmem:[#allocation9 + $0x24] sm:$0xf]
      %v261 = vld [vmem:[#allocation9 + $0x28] sm:$0xf]
      %v262 = vld [vmem:[#allocation9 + $0x2c] sm:$0xf]
      %v263 = vld [vmem:[#allocation9 + $0x30] sm:$0xf]
      %v264 = vld [vmem:[#allocation9 + $0x34] sm:$0xf]
      %v265 = vld [vmem:[#allocation9 + $0x38] sm:$0xf]
      %v266 = vld [vmem:[#allocation9 + $0x3c] sm:$0xf]
      %v283 = vunpack.c.l.b16 %v251
      %v284 = vunpack.c.l.b16 %v252
      %v285 = vunpack.c.l.b16 %v253
      %v286 = vunpack.c.l.b16 %v254
      %v287 = vunpack.c.l.b16 %v255
      %v288 = vunpack.c.l.b16 %v256
      %v289 = vunpack.c.l.b16 %v257
      %v290 = vunpack.c.l.b16 %v258
      %v291 = vunpack.c.l.b16 %v259
      %v292 = vunpack.c.l.b16 %v260
      %v293 = vunpack.c.l.b16 %v261
      %v294 = vunpack.c.l.b16 %v262
      %v295 = vunpack.c.l.b16 %v263
      %v296 = vunpack.c.l.b16 %v264
      %v297 = vunpack.c.l.b16 %v265
      %v298 = vunpack.c.l.b16 %v266
      %v299 = vpack.c.b16 %v284, %v283
      %v300 = vpack.c.b16 %v286, %v285
      %v301 = vpack.c.b16 %v288, %v287
      %v302 = vpack.c.b16 %v290, %v289
      %v303 = vpack.c.b16 %v292, %v291
      %v304 = vpack.c.b16 %v294, %v293
      %v305 = vpack.c.b16 %v296, %v295
      %v306 = vpack.c.b16 %v298, %v297
      %315 = vmatprep.subr.bf16.mxu0 0
      %316 = vmatpush1.bf16.msra.mxu0 %v299
      %317 = vmatprep.subr.bf16.mxu0 0
      %318 = vmatpush1.bf16.msra.mxu0 %v300
      %319 = vmatprep.subr.bf16.mxu0 0
      %320 = vmatpush1.bf16.msra.mxu0 %v301
      %321 = vmatprep.subr.bf16.mxu0 0
      %322 = vmatpush1.bf16.msra.mxu0 %v302
      %323 = vmatprep.subr.bf16.mxu0 0
      %324 = vmatpush1.bf16.msra.mxu0 %v303
      %325 = vmatprep.subr.bf16.mxu0 0
      %326 = vmatpush1.bf16.msra.mxu0 %v304
      %327 = vmatprep.subr.bf16.mxu0 0
      %328 = vmatpush1.bf16.msra.mxu0 %v305
      %329 = vmatprep.subr.bf16.mxu0 0
      %330 = vmatpush1.bf16.msra.mxu0 %v306
      %331 = vmatprep.subr.bf16.mxu0 0
      %332 = vmatpush1.bf16.msra.mxu0 0
      %333 = vmatprep.subr.bf16.mxu0 0
      %334 = vmatpush1.bf16.msra.mxu0 0
      %335 = vmatprep.subr.bf16.mxu0 0
      %336 = vmatpush1.bf16.msra.mxu0 0
      %337 = vmatprep.subr.bf16.mxu0 0
      %338 = vmatpush1.bf16.msra.mxu0 0
      %339 = vmatprep.subr.bf16.mxu0 0
      %340 = vmatpush1.bf16.msra.mxu0 0
      %341 = vmatprep.subr.bf16.mxu0 0
      %342 = vmatpush1.bf16.msra.mxu0 0
      %343 = vmatprep.subr.bf16.mxu0 0
      %344 = vmatpush1.bf16.msra.mxu0 0
      %345 = vmatprep.subr.bf16.mxu0 0
      %346 = vmatpush1.bf16.msra.mxu0 0
      %347 = vmatprep.mubr.bf16.mxu0 0
      %348 = vmatmul.mubr.bf16.gmra.mrb[0].mxu0 %v250
      %v349 = vpop.f32.mrb[0].mxu0
      %v350 = vadd.f32 0.0, %v349
      %v351 = vpop.f32.mrb[0].mxu0
      %v352 = vpop.f32.mrb[0].mxu0
      %v353 = vpop.f32.mrb[0].mxu0
      %354 = vdwg.mxu0
      %v355 = vpack.c.bf16 %v350, %v350
      %356 = vst [vmem:[#allocation11] sm:$0xf] %v355
    $region45: #{tpu_custom_call.1} parent=1 // pred_fallthru
      _
    // Predicated region
    $region46: #{tpu_custom_call.1} parent=1 // pred_check
      _
    $region47: #{tpu_custom_call.1} parent=1 // pred_check_branch
      %358 = sbr.rel (0) target = $region49
    $region48: #{tpu_custom_call.1} parent=1 // pred_region
      %s360 = ssub.s32 64, 64
      %361 = vsyncadd [#allocation5], %s360
      %s363 = sshll.u32 [#allocation11], 4
      %s364 = int_to_ptr.vmem [resolvable:$true] %s363
      %366 = dma.vmem_to_hbm [thread:$0]  %s364, 64, %s5, [#allocation5]
    $region49: #{tpu_custom_call.1} parent=1 // pred_fallthru
      _
    // Predicated region
    $region50: #{tpu_custom_call.1} parent=1 // pred_check
      _
    $region51: #{tpu_custom_call.1} parent=1 // pred_check_branch
      %368 = sbr.rel (0) target = $region53
    $region52: #{tpu_custom_call.1} parent=1 // pred_region
      %369 = dma.done [#allocation5], 64
    $region53: #{tpu_custom_call.1} parent=1 // pred_fallthru
      _
    %370 = vsyncpa [#allocation4], 1
    %371 = vsyncpa [#allocation7], 1
    %372 = vsyncpa [#allocation10], 1
    %373 = vsyncpa [#allocation5], 1

</llo_original>
